<compile_context>
chip_gen: v5e
topology: v5e:2x2
jax: 0.10.0
libtpu: 0.0.40
codegen_flags: <defaults>
</compile_context>

<pallas_src>
import functools

import numpy as np

import jax
import jax.numpy as jnp
from jax.experimental import pallas as pl
from jax.experimental.pallas import tpu as pltpu


_LANE = 128                      # TPU lane width
_DEFAULT_TILE_N_SMALL = 1024     # rows / grid step (>=512-row roofline knee)
_DEFAULT_TILE_N_LARGE = 2048     # for very large batches (amortize ~0.35us/step)
_LARGE_N_THRESHOLD = 128 * 1024
_TARGET_GRID_STEPS = 4           # multiple of 2 so both v7x TCs get work


def _round_up(x, m):
    return (x + m - 1) // m * m


def _sublane_mult(dtype):
    # rows per packed (sublane, 128-lane) tile: 8 for 32-bit, 16 for bf16
    return 8 * 4 // np.dtype(dtype).itemsize


def _vmem_tile_bytes(rows, cols, dtype):
    """VMEM bytes of one (rows, cols) buffer after (sublane, 128-lane) padding."""
    d = np.dtype(dtype)
    return _round_up(rows, _sublane_mult(d)) * _round_up(cols, _LANE) * d.itemsize


def _mlp_kernel(num_pieces, *refs):
    """Fused  concat -> Linear -> ReLU -> Linear  on one (tile_n, :) row block.

    refs = (x_0..x_{p-1}, w1_0..w1_{p-1}, b1, w2, b2, out)
    The concat is folded into the first matmul: sum_k x_k @ w1_k.
    """
    x_refs = refs[:num_pieces]
    w1_refs = refs[num_pieces:2 * num_pieces]
    b1_ref, w2_ref, b2_ref, o_ref = refs[2 * num_pieces:]

    acc = jnp.dot(x_refs[0][...], w1_refs[0][...],
                  preferred_element_type=jnp.float32)
    for x_r, w_r in zip(x_refs[1:], w1_refs[1:]):
        acc += jnp.dot(x_r[...], w_r[...], preferred_element_type=jnp.float32)

    # bias add + ReLU kept in f32 (safe on v5e, which has no bf16 VPU)
    h = jnp.maximum(acc + b1_ref[...].astype(jnp.float32), 0.0)

    y = jnp.dot(h.astype(w2_ref.dtype), w2_ref[...],
                preferred_element_type=jnp.float32)
    y = y + b2_ref[...].astype(jnp.float32)
    o_ref[...] = y.astype(o_ref.dtype)


def message_function_forward(source_memory, target_memory, params,
                             edge_features=None, *,
                             compute_dtype=jnp.bfloat16,
                             out_dtype=None,
                             tile_n=None):
    """JAX/Pallas equivalent of MessageFunction.forward.

    compute_dtype: matmul-operand dtype for activations / weights (f32 MXU
      accumulation is always used).  bf16 by default: the kernel is HBM-read
      bound, so halving activation bytes is the dominant wall-time lever.
    out_dtype: output dtype; defaults to compute_dtype (halves writeback
      bytes).  Pass jnp.float32 for a full-precision output.
    tile_n: rows per grid step; default 1024 (2048 for very large batches).
    """
    pieces = [source_memory, target_memory]
    if edge_features is not None:
        pieces.append(edge_features)

    w1, b1, w2, b2 = params["w1"], params["b1"], params["w2"], params["b2"]
    n = pieces[0].shape[0]
    msg_dim = w2.shape[1]
    dims = [p.shape[1] for p in pieces]
    assert w1.shape[0] == sum(dims), "w1 rows must equal concat feature width"

    compute_dtype = np.dtype(compute_dtype)
    out_dtype = np.dtype(compute_dtype if out_dtype is None else out_dtype)
    if tile_n is None:
        tile_n = (_DEFAULT_TILE_N_LARGE if n >= _LARGE_N_THRESHOLD
                  else _DEFAULT_TILE_N_SMALL)

    # --- pad hidden dim to a lane multiple (zero cols/rows: numerically exact)
    hidden = w1.shape[1]
    hidden_pad = _round_up(hidden, _LANE)
    if hidden_pad != hidden:
        w1 = jnp.pad(w1, ((0, 0), (0, hidden_pad - hidden)))
        b1 = jnp.pad(b1, ((0, 0), (0, hidden_pad - hidden)))
        w2 = jnp.pad(w2, ((0, hidden_pad - hidden), (0, 0)))

    # --- split w1 row-wise so concat(pieces) @ w1 == sum_k piece_k @ w1_k ----
    offs = [0]
    for d in dims:
        offs.append(offs[-1] + d)
    w1_pieces = [w1[offs[k]:offs[k + 1], :] for k in range(len(pieces))]

    # --- matmul operands in compute dtype; biases / accumulation stay f32 ----
    pieces = [p.astype(compute_dtype) for p in pieces]
    w1_pieces = [w.astype(compute_dtype) for w in w1_pieces]
    w2 = w2.astype(compute_dtype)
    b1 = b1.astype(jnp.float32)
    b2 = b2.astype(jnp.float32)

    # --- tile the edge axis; pad the tail up to a whole tile -----------------
    row_mult = _sublane_mult(compute_dtype)         # 16 for bf16, 8 for f32
    tn = min(_round_up(tile_n, row_mult), _round_up(n, row_mult))
    # v7x megacore: guarantee >=2 (target 4) grid steps whenever there is
    # enough work, so the "parallel" axis actually splits across both TCs.
    if n >= _TARGET_GRID_STEPS * row_mult:
        tn = min(tn, _round_up(pl.cdiv(n, _TARGET_GRID_STEPS), row_mult))
    elif n >= 2 * row_mult:
        tn = min(tn, _round_up(pl.cdiv(n, 2), row_mult))
    n_pad = _round_up(n, tn)
    if n_pad != n:
        # padded tail rows compute relu(b1)@w2+b2 garbage; sliced off below
        pieces = [jnp.pad(p, ((0, n_pad - n), (0, 0))) for p in pieces]
    num_tiles = n_pad // tn
    num_pieces = len(pieces)

    x_specs = [pl.BlockSpec((tn, d), lambda i: (i, 0)) for d in dims]
    w1_specs = [pl.BlockSpec((d, hidden_pad), lambda i: (0, 0)) for d in dims]
    const_specs = [
        pl.BlockSpec((1, hidden_pad), lambda i: (0, 0)),        # b1 (resident)
        pl.BlockSpec((hidden_pad, msg_dim), lambda i: (0, 0)),  # w2 (resident)
        pl.BlockSpec((1, msg_dim), lambda i: (0, 0)),           # b2 (resident)
    ]
    out_spec = pl.BlockSpec((tn, msg_dim), lambda i: (i, 0))

    # --- explicit VMEM budget from the real (lane-padded) per-step footprint -
    x_bytes = sum(_vmem_tile_bytes(tn, d, compute_dtype) for d in dims)
    w1_bytes = sum(_vmem_tile_bytes(d, hidden_pad, compute_dtype) for d in dims)
    const_bytes = (_vmem_tile_bytes(1, hidden_pad, jnp.float32)
                   + _vmem_tile_bytes(hidden_pad, msg_dim, compute_dtype)
                   + _vmem_tile_bytes(1, msg_dim, jnp.float32))
    out_bytes = _vmem_tile_bytes(tn, msg_dim, out_dtype)
    interm_bytes = 2 * _vmem_tile_bytes(tn, hidden_pad, jnp.float32)  # acc + h
    footprint = 2 * (x_bytes + w1_bytes + const_bytes + out_bytes) + interm_bytes
    vmem_limit = int(min(max(int(footprint * 1.5), 32 << 20), 64 << 20))

    # advisory cost hint: HBM-bytes dominated at realistic sizes
    input_dim = sum(dims)
    flops = 2 * n_pad * (input_dim * hidden_pad + hidden_pad * msg_dim)
    bytes_accessed = (
        sum(int(p.size) * p.dtype.itemsize for p in pieces)
        + sum(int(w.size) * w.dtype.itemsize for w in w1_pieces)
        + int(w2.size) * w2.dtype.itemsize
        + int(b1.size) * b1.dtype.itemsize + int(b2.size) * b2.dtype.itemsize
        + n_pad * msg_dim * out_dtype.itemsize)

    out = pl.pallas_call(
        functools.partial(_mlp_kernel, num_pieces),
        out_shape=jax.ShapeDtypeStruct((n_pad, msg_dim), out_dtype),
        grid=(num_tiles,),
        in_specs=x_specs + w1_specs + const_specs,
        out_specs=out_spec,
        compiler_params=pltpu.CompilerParams(
            dimension_semantics=("parallel",),   # rows independent -> v7x 2 TCs
            vmem_limit_bytes=vmem_limit),
        cost_estimate=pl.CostEstimate(
            flops=flops, transcendentals=0, bytes_accessed=bytes_accessed),
    )(*pieces, *w1_pieces, b1, w2, b2)

    return out[:n] if n_pad != n else out


def init_params(key, memory_dim, message_dim, edge_dim=None, dtype=jnp.float32):
    """Parameter init matching the nn.Linear shapes.

    PyTorch Linear stores weight as (out, in) and computes x @ W.T + b.
    We store transposed weights (in, out) so the kernel does x @ W + b,
    which is numerically equivalent.
    """
    input_dim = 2 * memory_dim + (edge_dim if edge_dim is not None else 0)
    hidden = 2 * message_dim
    k1, k2, k3, k4 = jax.random.split(key, 4)
    s1 = 1.0 / jnp.sqrt(input_dim)
    s2 = 1.0 / jnp.sqrt(hidden)
    return {
        "w1": jax.random.uniform(k1, (input_dim, hidden), dtype, -s1, s1),
        "b1": jax.random.uniform(k2, (1, hidden), dtype, -s1, s1),
        "w2": jax.random.uniform(k3, (hidden, message_dim), dtype, -s2, s2),
        "b2": jax.random.uniform(k4, (1, message_dim), dtype, -s2, s2),
    }


def _reference(source_memory, target_memory, params, edge_features=None):
    if edge_features is not None:
        x = jnp.concatenate([source_memory, target_memory, edge_features], axis=1)
    else:
        x = jnp.concatenate([source_memory, target_memory], axis=1)
    h = jnp.maximum(x @ params["w1"] + params["b1"], 0.0)
    return h @ params["w2"] + params["b2"]


if __name__ == "__main__":
    memory_dim, message_dim, edge_dim = 32, 32, 16
    n_edges = 8

    key = jax.random.PRNGKey(0)
    kp, kp2, ks, kt, ke, kbig = jax.random.split(key, 6)

    params = init_params(kp, memory_dim, message_dim, edge_dim)
    src = jax.random.normal(ks, (n_edges, memory_dim), jnp.float32)
    tgt = jax.random.normal(kt, (n_edges, memory_dim), jnp.float32)
    edg = jax.random.normal(ke, (n_edges, edge_dim), jnp.float32)
    ref = _reference(src, tgt, params, edg)

    # 1) default path: bf16 activations/weights/output, f32 MXU accumulation
    out = jax.block_until_ready(message_function_forward(src, tgt, params, edg))
    assert out.shape == (n_edges, message_dim)
    assert out.dtype == jnp.bfloat16
    assert jnp.allclose(out.astype(jnp.float32), ref, atol=7.5e-2, rtol=7.5e-2)

    # 2) full f32 path matches the reference tightly
    out_f32 = jax.block_until_ready(
        message_function_forward(src, tgt, params, edg,
                                 compute_dtype=jnp.float32))
    assert out_f32.dtype == jnp.float32
    assert jnp.allclose(out_f32, ref, atol=1e-5, rtol=1e-5)

    # 3) no edge features (edge_dim=None path), f32 for an exact check
    params_ne = init_params(kp2, memory_dim, message_dim, None)
    out_ne = jax.block_until_ready(
        message_function_forward(src, tgt, params_ne,
                                 compute_dtype=jnp.float32))
    ref_ne = _reference(src, tgt, params_ne)
    assert out_ne.shape == (n_edges, message_dim)
    assert jnp.allclose(out_ne, ref_ne, atol=1e-5, rtol=1e-5)

    # 4) multi-tile grid + tail padding + >=2 grid steps (n not tile-aligned)
    n_big = 40
    kb1, kb2, kb3 = jax.random.split(kbig, 3)
    src_b = jax.random.normal(kb1, (n_big, memory_dim), jnp.float32)
    tgt_b = jax.random.normal(kb2, (n_big, memory_dim), jnp.float32)
    edg_b = jax.random.normal(kb3, (n_big, edge_dim), jnp.float32)
    ref_b = _reference(src_b, tgt_b, params, edg_b)
    out_b32 = jax.block_until_ready(
        message_function_forward(src_b, tgt_b, params, edg_b,
                                 compute_dtype=jnp.float32, tile_n=16))
    assert out_b32.shape == (n_big, message_dim)
    assert jnp.allclose(out_b32, ref_b, atol=1e-5, rtol=1e-5)
    out_b16 = jax.block_until_ready(
        message_function_forward(src_b, tgt_b, params, edg_b, tile_n=16))
    assert out_b16.dtype == jnp.bfloat16
    assert jnp.allclose(out_b16.astype(jnp.float32), ref_b,
                        atol=7.5e-2, rtol=7.5e-2)

    # 5) f32 output requested from the (default) bf16 compute path
    out_bf_f32 = jax.block_until_ready(
        message_function_forward(src, tgt, params, edg, out_dtype=jnp.float32))
    assert out_bf_f32.dtype == jnp.float32
    assert jnp.allclose(out_bf_f32, ref, atol=7.5e-2, rtol=7.5e-2)

    print("KERNEL_OK")
</pallas_src>

<mosaic_0001>
module attributes {stable_mosaic.version = 11 : i64} {
  func.func @_mlp_kernel(%arg0: i32, %arg1: memref<16x32xbf16, #tpu.memory_space<vmem>>, %arg2: memref<16x32xbf16, #tpu.memory_space<vmem>>, %arg3: memref<16x16xbf16, #tpu.memory_space<vmem>>, %arg4: memref<32x128xbf16, #tpu.memory_space<vmem>>, %arg5: memref<32x128xbf16, #tpu.memory_space<vmem>>, %arg6: memref<16x128xbf16, #tpu.memory_space<vmem>>, %arg7: memref<1x128xf32, #tpu.memory_space<vmem>>, %arg8: memref<128x32xbf16, #tpu.memory_space<vmem>>, %arg9: memref<1x32xf32, #tpu.memory_space<vmem>>, %arg10: memref<16x32xbf16, #tpu.memory_space<vmem>>) attributes {dimension_semantics = [#tpu.dimension_semantics<parallel>], iteration_bounds = array<i64: 1>, scalar_prefetch = 0 : i64, scratch_operands = 0 : i64, tpu.core_type = #tpu.core_type<tc>, window_params = [{transform_indices = @transform_0, window_bounds = array<i64: 16, 32>}, {transform_indices = @transform_1, window_bounds = array<i64: 16, 32>}, {transform_indices = @transform_2, window_bounds = array<i64: 16, 16>}, {pipeline_mode = #tpu.pipeline_mode<synchronous>, transform_indices = @transform_3, window_bounds = array<i64: 32, 128>}, {pipeline_mode = #tpu.pipeline_mode<synchronous>, transform_indices = @transform_4, window_bounds = array<i64: 32, 128>}, {pipeline_mode = #tpu.pipeline_mode<synchronous>, transform_indices = @transform_5, window_bounds = array<i64: 16, 128>}, {pipeline_mode = #tpu.pipeline_mode<synchronous>, transform_indices = @transform_6, window_bounds = array<i64: 1, 128>}, {pipeline_mode = #tpu.pipeline_mode<synchronous>, transform_indices = @transform_7, window_bounds = array<i64: 128, 32>}, {pipeline_mode = #tpu.pipeline_mode<synchronous>, transform_indices = @transform_8, window_bounds = array<i64: 1, 32>}, {transform_indices = @transform_9, window_bounds = array<i64: 16, 32>}]} {
    %c0 = arith.constant 0 : index
    %c0_0 = arith.constant 0 : index
    %0 = vector.load %arg1[%c0, %c0_0] : memref<16x32xbf16, #tpu.memory_space<vmem>>, vector<16x32xbf16>
    %c0_1 = arith.constant 0 : index
    %c0_2 = arith.constant 0 : index
    %1 = vector.load %arg4[%c0_1, %c0_2] : memref<32x128xbf16, #tpu.memory_space<vmem>>, vector<32x128xbf16>
    %cst = arith.constant dense<0.000000e+00> : vector<16x128xf32>
    %2 = tpu.matmul %0, %1, %cst {dimension_numbers = #tpu.dot_dimension_numbers<[1], [0], [0], [1], [0, 0, 1, 1], [], []>} : vector<16x32xbf16>, vector<32x128xbf16>, vector<16x128xf32> -> vector<16x128xf32>
    %c0_3 = arith.constant 0 : index
    %c0_4 = arith.constant 0 : index
    %3 = vector.load %arg2[%c0_3, %c0_4] : memref<16x32xbf16, #tpu.memory_space<vmem>>, vector<16x32xbf16>
    %c0_5 = arith.constant 0 : index
    %c0_6 = arith.constant 0 : index
    %4 = vector.load %arg5[%c0_5, %c0_6] : memref<32x128xbf16, #tpu.memory_space<vmem>>, vector<32x128xbf16>
    %cst_7 = arith.constant dense<0.000000e+00> : vector<16x128xf32>
    %5 = tpu.matmul %3, %4, %cst_7 {dimension_numbers = #tpu.dot_dimension_numbers<[1], [0], [0], [1], [0, 0, 1, 1], [], []>} : vector<16x32xbf16>, vector<32x128xbf16>, vector<16x128xf32> -> vector<16x128xf32>
    %6 = arith.addf %2, %5 : vector<16x128xf32>
    %c0_8 = arith.constant 0 : index
    %c0_9 = arith.constant 0 : index
    %7 = vector.load %arg3[%c0_8, %c0_9] : memref<16x16xbf16, #tpu.memory_space<vmem>>, vector<16x16xbf16>
    %c0_10 = arith.constant 0 : index
    %c0_11 = arith.constant 0 : index
    %8 = vector.load %arg6[%c0_10, %c0_11] : memref<16x128xbf16, #tpu.memory_space<vmem>>, vector<16x128xbf16>
    %cst_12 = arith.constant dense<0.000000e+00> : vector<16x128xf32>
    %9 = tpu.matmul %7, %8, %cst_12 {dimension_numbers = #tpu.dot_dimension_numbers<[1], [0], [0], [1], [0, 0, 1, 1], [], []>} : vector<16x16xbf16>, vector<16x128xbf16>, vector<16x128xf32> -> vector<16x128xf32>
    %10 = arith.addf %6, %9 : vector<16x128xf32>
    %c0_13 = arith.constant 0 : index
    %c0_14 = arith.constant 0 : index
    %11 = vector.load %arg7[%c0_13, %c0_14] : memref<1x128xf32, #tpu.memory_space<vmem>>, vector<1x128xf32>
    %12 = vector.broadcast %11 : vector<1x128xf32> to vector<16x128xf32>
    %13 = arith.addf %10, %12 : vector<16x128xf32>
    %cst_15 = arith.constant 0.000000e+00 : f32
    %14 = vector.broadcast %cst_15 : f32 to vector<16x128xf32>
    %15 = arith.maximumf %13, %14 : vector<16x128xf32>
    %16 = arith.truncf %15 : vector<16x128xf32> to vector<16x128xbf16>
    %c0_16 = arith.constant 0 : index
    %c0_17 = arith.constant 0 : index
    %17 = vector.load %arg8[%c0_16, %c0_17] : memref<128x32xbf16, #tpu.memory_space<vmem>>, vector<128x32xbf16>
    %cst_18 = arith.constant dense<0.000000e+00> : vector<16x32xf32>
    %18 = tpu.matmul %16, %17, %cst_18 {dimension_numbers = #tpu.dot_dimension_numbers<[1], [0], [0], [1], [0, 0, 1, 1], [], []>} : vector<16x128xbf16>, vector<128x32xbf16>, vector<16x32xf32> -> vector<16x32xf32>
    %c0_19 = arith.constant 0 : index
    %c0_20 = arith.constant 0 : index
    %19 = vector.load %arg9[%c0_19, %c0_20] : memref<1x32xf32, #tpu.memory_space<vmem>>, vector<1x32xf32>
    %20 = vector.broadcast %19 : vector<1x32xf32> to vector<16x32xf32>
    %21 = arith.addf %18, %20 : vector<16x32xf32>
    %22 = arith.truncf %21 : vector<16x32xf32> to vector<16x32xbf16>
    %c0_21 = arith.constant 0 : index
    %c0_22 = arith.constant 0 : index
    %23 = vector.load %arg10[%c0_21, %c0_22] : memref<16x32xbf16, #tpu.memory_space<vmem>>, vector<16x32xbf16>
    tpu.vector_store %arg10[%c0_21, %c0_22], %22 {strides = array<i32>} : memref<16x32xbf16, #tpu.memory_space<vmem>>, vector<16x32xbf16>,
    return
  }
  func.func @transform_0(%arg0: i32) -> (i32, i32) {
    %c0_i32 = arith.constant 0 : i32
    %c0_i32_0 = arith.constant 0 : i32
    return %arg0, %c0_i32 : i32, i32
  }
  func.func @transform_1(%arg0: i32) -> (i32, i32) {
    %c0_i32 = arith.constant 0 : i32
    %c0_i32_0 = arith.constant 0 : i32
    return %arg0, %c0_i32 : i32, i32
  }
  func.func @transform_2(%arg0: i32) -> (i32, i32) {
    %c0_i32 = arith.constant 0 : i32
    %c0_i32_0 = arith.constant 0 : i32
    return %arg0, %c0_i32 : i32, i32
  }
  func.func @transform_3(%arg0: i32) -> (i32, i32) {
    %c0_i32 = arith.constant 0 : i32
    %c0_i32_0 = arith.constant 0 : i32
    %c0_i32_1 = arith.constant 0 : i32
    return %c0_i32, %c0_i32_0 : i32, i32
  }
  func.func @transform_4(%arg0: i32) -> (i32, i32) {
    %c0_i32 = arith.constant 0 : i32
    %c0_i32_0 = arith.constant 0 : i32
    %c0_i32_1 = arith.constant 0 : i32
    return %c0_i32, %c0_i32_0 : i32, i32
  }
  func.func @transform_5(%arg0: i32) -> (i32, i32) {
    %c0_i32 = arith.constant 0 : i32
    %c0_i32_0 = arith.constant 0 : i32
    %c0_i32_1 = arith.constant 0 : i32
    return %c0_i32, %c0_i32_0 : i32, i32
  }
  func.func @transform_6(%arg0: i32) -> (i32, i32) {
    %c0_i32 = arith.constant 0 : i32
    %c0_i32_0 = arith.constant 0 : i32
    %c0_i32_1 = arith.constant 0 : i32
    return %c0_i32, %c0_i32_0 : i32, i32
  }
  func.func @transform_7(%arg0: i32) -> (i32, i32) {
    %c0_i32 = arith.constant 0 : i32
    %c0_i32_0 = arith.constant 0 : i32
    %c0_i32_1 = arith.constant 0 : i32
    return %c0_i32, %c0_i32_0 : i32, i32
  }
  func.func @transform_8(%arg0: i32) -> (i32, i32) {
    %c0_i32 = arith.constant 0 : i32
    %c0_i32_0 = arith.constant 0 : i32
    %c0_i32_1 = arith.constant 0 : i32
    return %c0_i32, %c0_i32_0 : i32, i32
  }
  func.func @transform_9(%arg0: i32) -> (i32, i32) {
    %c0_i32 = arith.constant 0 : i32
    %c0_i32_0 = arith.constant 0 : i32
    return %arg0, %c0_i32 : i32, i32
  }
}

</mosaic_0001>

<llo_original>
// kernel: tpu_custom_call.1
$region0: #{tpu_custom_call.1}
  #allocation0 [shape = 'u32[]', space=smem, size = 0x4, offset = 0x4, fixed_abs, tag = 'smem constant byte address 0x4 - core index']
  #allocation1 [shape = 'u32[72,128]{1,0:T(1,128)}', space=vmem, size = 0x9000, scoped, tag = 'internal scratch']
  %s0 = inlined_call_operand.vmem [shape: bf16[16,32], index: 0, kind: input, shape index: {}]
  %s1 = inlined_call_operand.vmem [shape: bf16[16,32], index: 1, kind: input, shape index: {}]
  %s2 = inlined_call_operand.vmem [shape: bf16[16,16], index: 2, kind: input, shape index: {}]
  %s3 = inlined_call_operand.vmem [shape: bf16[32,128], index: 3, kind: input, shape index: {}]
  %s4 = inlined_call_operand.vmem [shape: bf16[32,128], index: 4, kind: input, shape index: {}]
  %s5 = inlined_call_operand.vmem [shape: bf16[16,128], index: 5, kind: input, shape index: {}]
  %s6 = inlined_call_operand.vmem [shape: f32[1,128], index: 6, kind: input, shape index: {}]
  %s7 = inlined_call_operand.vmem [shape: bf16[128,32], index: 7, kind: input, shape index: {}]
  %s8 = inlined_call_operand.vmem [shape: f32[1,32], index: 8, kind: input, shape index: {}]
  %s9 = inlined_call_operand.hbm [shape: bf16[16,32], index: 9, kind: output, shape index: {}]
  %s10 = sld [smem:[#allocation0]]
  $region46: #{tpu_custom_call.1} parent=0
    _
  %s12 = ssub.s32 1, %s10
  %s13 = scalar_select 0, %s12, %s10
  $region1: #{tpu_custom_call.1} parent=0
    #allocation2 [shape = 'u8[4096]{0}', space=vmem, size = 0x1000, scoped, tag = 'output window, operand 0, single buffered']
    #allocation3 [shape = 's32[1]{0}', space=sflag, size = 0x4, scoped, tag = 'scoped memory for tpu_custom_call.1']
    %14 = vsyncpa [#allocation3], 0
    // Predicated region
    $region2: #{tpu_custom_call.1} parent=1 // pred_check
      _
    $region3: #{tpu_custom_call.1} parent=1 // pred_check_branch
      %16 = sbr.rel (0) target = $region5
    $region4: #{tpu_custom_call.1} parent=1 // pred_region
      _
    $region5: #{tpu_custom_call.1} parent=1 // pred_fallthru
      _
    // Predicated region
    $region6: #{tpu_custom_call.1} parent=1 // pred_check
      _
    $region7: #{tpu_custom_call.1} parent=1 // pred_check_branch
      %18 = sbr.rel (0) target = $region9
    $region8: #{tpu_custom_call.1} parent=1 // pred_region
      _
    $region9: #{tpu_custom_call.1} parent=1 // pred_fallthru
      _
    // Predicated region
    $region10: #{tpu_custom_call.1} parent=1 // pred_check
      _
    $region11: #{tpu_custom_call.1} parent=1 // pred_check_branch
      %20 = sbr.rel (0) target = $region13
    $region12: #{tpu_custom_call.1} parent=1 // pred_region
      _
    $region13: #{tpu_custom_call.1} parent=1 // pred_fallthru
      _
    // Predicated region
    $region14: #{tpu_custom_call.1} parent=1 // pred_check
      _
    $region15: #{tpu_custom_call.1} parent=1 // pred_check_branch
      %22 = sbr.rel (0) target = $region17
    $region16: #{tpu_custom_call.1} parent=1 // pred_region
      _
    $region17: #{tpu_custom_call.1} parent=1 // pred_fallthru
      _
    // Predicated region
    $region18: #{tpu_custom_call.1} parent=1 // pred_check
      _
    $region19: #{tpu_custom_call.1} parent=1 // pred_check_branch
      %24 = sbr.rel (0) target = $region21
    $region20: #{tpu_custom_call.1} parent=1 // pred_region
      _
    $region21: #{tpu_custom_call.1} parent=1 // pred_fallthru
      _
    // Predicated region
    $region22: #{tpu_custom_call.1} parent=1 // pred_check
      _
    $region23: #{tpu_custom_call.1} parent=1 // pred_check_branch
      %26 = sbr.rel (0) target = $region25
    $region24: #{tpu_custom_call.1} parent=1 // pred_region
      _
    $region25: #{tpu_custom_call.1} parent=1 // pred_fallthru
      _
    // Predicated region
    $region26: #{tpu_custom_call.1} parent=1 // pred_check
      _
    $region27: #{tpu_custom_call.1} parent=1 // pred_check_branch
      %28 = sbr.rel (0) target = $region29
    $region28: #{tpu_custom_call.1} parent=1 // pred_region
      _
    $region29: #{tpu_custom_call.1} parent=1 // pred_fallthru
      _
    // Predicated region
    $region30: #{tpu_custom_call.1} parent=1 // pred_check
      _
    $region31: #{tpu_custom_call.1} parent=1 // pred_check_branch
      %30 = sbr.rel (0) target = $region33
    $region32: #{tpu_custom_call.1} parent=1 // pred_region
      _
    $region33: #{tpu_custom_call.1} parent=1 // pred_fallthru
      _
    // Predicated region
    $region34: #{tpu_custom_call.1} parent=1 // pred_check
      _
    $region35: #{tpu_custom_call.1} parent=1 // pred_check_branch
      %32 = sbr.rel (0) target = $region37
    $region36: #{tpu_custom_call.1} parent=1 // pred_region
      _
    $region37: #{tpu_custom_call.1} parent=1 // pred_fallthru
      _
    %v34 = vld [vmem:[%s0] sm:$0xf]
    %v35 = vld [vmem:[%s0 + $0x4] sm:$0xf]
    %v36 = vld [vmem:[%s3] sm:$0xf]
    %v37 = vld [vmem:[%s3 + $0x4] sm:$0xf]
    %v38 = vld [vmem:[%s3 + $0x8] sm:$0xf]
    %v39 = vld [vmem:[%s3 + $0xc] sm:$0xf]
    %v40 = vld [vmem:[%s1] sm:$0xf]
    %v41 = vld [vmem:[%s1 + $0x4] sm:$0xf]
    %v42 = vld [vmem:[%s4] sm:$0xf]
    %v43 = vld [vmem:[%s4 + $0x4] sm:$0xf]
    %v44 = vld [vmem:[%s4 + $0x8] sm:$0xf]
    %v45 = vld [vmem:[%s4 + $0xc] sm:$0xf]
    %v48 = vunpack.c.l.b16 %v40
    %v49 = vunpack.c.l.b16 %v41
    %v50 = vpack.c.b16 %v49, %v48
    %v55 = vunpack.c.l.b16 %v42
    %v56 = vunpack.c.l.b16 %v43
    %v57 = vunpack.c.l.b16 %v44
    %v58 = vunpack.c.l.b16 %v45
    %v59 = vpack.c.b16 %v56, %v55
    %v60 = vpack.c.b16 %v58, %v57
    %vm63 = vcmask 261120
    %v65 = vsel %vm63, %v50, 0
    %67 = vmatpush.bf16.msra.mxu0 0
    %68 = vmatpush.bf16.msra.mxu0 0
    %69 = vmatpush.bf16.msra.mxu0 0
    %70 = vmatpush.bf16.msra.mxu0 0
    %71 = vmatpush.bf16.msra.mxu0 0
    %72 = vmatpush.bf16.msra.mxu0 0
    %73 = vmatpush.bf16.msra.mxu0 %v60
    %74 = vmatpush.bf16.msra.mxu0 %v59
    %75 = vmatmul.bf16.gmra.mxu0 %v65
    %v76 = vpop.f32.mrf.mxu0
    %v77 = vadd.f32 0.0, %v76
    %v78 = vpop.f32.mrf.mxu0
    %v79 = vadd.f32 0.0, %v78
    %80 = vdwg.mxu0
    %v83 = vunpack.c.l.b16 %v34
    %v84 = vunpack.c.l.b16 %v35
    %v85 = vpack.c.b16 %v84, %v83
    %v90 = vunpack.c.l.b16 %v36
    %v91 = vunpack.c.l.b16 %v37
    %v92 = vunpack.c.l.b16 %v38
    %v93 = vunpack.c.l.b16 %v39
    %v94 = vpack.c.b16 %v91, %v90
    %v95 = vpack.c.b16 %v93, %v92
    %v99 = vsel %vm63, %v85, 0
    %101 = vmatpush.bf16.msra.mxu0 0
    %102 = vmatpush.bf16.msra.mxu0 0
    %103 = vmatpush.bf16.msra.mxu0 0
    %104 = vmatpush.bf16.msra.mxu0 0
    %105 = vmatpush.bf16.msra.mxu0 0
    %106 = vmatpush.bf16.msra.mxu0 0
    %107 = vmatpush.bf16.msra.mxu0 %v95
    %108 = vmatpush.bf16.msra.mxu0 %v94
    %109 = vmatmul.bf16.gmra.mxu0 %v99
    %v110 = vpop.f32.mrf.mxu0
    %v111 = vadd.f32 %v77, %v110
    %v112 = vpop.f32.mrf.mxu0
    %v113 = vadd.f32 %v79, %v112
    %114 = vdwg.mxu0
    %v115 = vld [vmem:[%s2] sm:$0xf]
    %v116 = vld [vmem:[%s2 + $0x4] sm:$0xf]
    %v117 = vld [vmem:[%s5] sm:$0xf]
    %v118 = vld [vmem:[%s5 + $0x4] sm:$0xf]
    %v121 = vunpack.c.l.b16 %v115
    %v122 = vunpack.c.l.b16 %v116
    %v123 = vpack.c.b16 %v122, %v121
    %v126 = vunpack.c.l.b16 %v117
    %v127 = vunpack.c.l.b16 %v118
    %v128 = vpack.c.b16 %v127, %v126
    %vm130 = vcmask 130048
    %v132 = vsel %vm130, %v123, 0
    %134 = vmatpush.bf16.msra.mxu0 0
    %135 = vmatpush.bf16.msra.mxu0 0
    %136 = vmatpush.bf16.msra.mxu0 0
    %137 = vmatpush.bf16.msra.mxu0 0
    %138 = vmatpush.bf16.msra.mxu0 0
    %139 = vmatpush.bf16.msra.mxu0 0
    %140 = vmatpush.bf16.msra.mxu0 0
    %141 = vmatpush.bf16.msra.mxu0 %v128
    %142 = vmatmul.bf16.gmra.mxu0 %v132
    %v143 = vpop.f32.mrf.mxu0
    %v144 = vadd.f32 0.0, %v143
    %v145 = vpop.f32.mrf.mxu0
    %v146 = vadd.f32 0.0, %v145
    %147 = vdwg.mxu0
    %v148 = vadd.f32 %v111, %v144
    %v149 = vadd.f32 %v113, %v146
    %v150 = vld [vmem:[%s6] sm:$0x1]
    %v152 = vperm.slane %v150, 0
    %v154 = vadd.f32 %v148, %v152
    %v155 = vadd.f32 %v149, %v152
    %v156 = vmax.f32 %v154, 0.0
    %v157 = vmax.f32 %v155, 0.0
    %v158 = vpack.c.bf16 %v157, %v156
    %v159 = vld [vmem:[%s7] sm:$0xf]
    %v160 = vld [vmem:[%s7 + $0x4] sm:$0xf]
    %v161 = vld [vmem:[%s7 + $0x8] sm:$0xf]
    %v162 = vld [vmem:[%s7 + $0xc] sm:$0xf]
    %v163 = vld [vmem:[%s7 + $0x10] sm:$0xf]
    %v164 = vld [vmem:[%s7 + $0x14] sm:$0xf]
    %v165 = vld [vmem:[%s7 + $0x18] sm:$0xf]
    %v166 = vld [vmem:[%s7 + $0x1c] sm:$0xf]
    %v167 = vld [vmem:[%s7 + $0x20] sm:$0xf]
    %v168 = vld [vmem:[%s7 + $0x24] sm:$0xf]
    %v169 = vld [vmem:[%s7 + $0x28] sm:$0xf]
    %v170 = vld [vmem:[%s7 + $0x2c] sm:$0xf]
    %v171 = vld [vmem:[%s7 + $0x30] sm:$0xf]
    %v172 = vld [vmem:[%s7 + $0x34] sm:$0xf]
    %v173 = vld [vmem:[%s7 + $0x38] sm:$0xf]
    %v174 = vld [vmem:[%s7 + $0x3c] sm:$0xf]
    %v175 = vld [vmem:[%s8] sm:$0x1]
    %v177 = vperm.slane %v175, 0
    %v195 = vunpack.c.l.b16 %v159
    %v196 = vunpack.c.l.b16 %v160
    %v197 = vunpack.c.l.b16 %v161
    %v198 = vunpack.c.l.b16 %v162
    %v199 = vunpack.c.l.b16 %v163
    %v200 = vunpack.c.l.b16 %v164
    %v201 = vunpack.c.l.b16 %v165
    %v202 = vunpack.c.l.b16 %v166
    %v203 = vunpack.c.l.b16 %v167
    %v204 = vunpack.c.l.b16 %v168
    %v205 = vunpack.c.l.b16 %v169
    %v206 = vunpack.c.l.b16 %v170
    %v207 = vunpack.c.l.b16 %v171
    %v208 = vunpack.c.l.b16 %v172
    %v209 = vunpack.c.l.b16 %v173
    %v210 = vunpack.c.l.b16 %v174
    %v211 = vpack.c.b16 %v196, %v195
    %v212 = vpack.c.b16 %v198, %v197
    %v213 = vpack.c.b16 %v200, %v199
    %v214 = vpack.c.b16 %v202, %v201
    %v215 = vpack.c.b16 %v204, %v203
    %v216 = vpack.c.b16 %v206, %v205
    %v217 = vpack.c.b16 %v208, %v207
    %v218 = vpack.c.b16 %v210, %v209
    %227 = vmatpush.bf16.msra.mxu0 %v218
    %228 = vmatpush.bf16.msra.mxu0 %v217
    %229 = vmatpush.bf16.msra.mxu0 %v216
    %230 = vmatpush.bf16.msra.mxu0 %v215
    %231 = vmatpush.bf16.msra.mxu0 %v214
    %232 = vmatpush.bf16.msra.mxu0 %v213
    %233 = vmatpush.bf16.msra.mxu0 %v212
    %234 = vmatpush.bf16.msra.mxu0 %v211
    %235 = vmatmul.bf16.gmra.mxu0 %v158
    %v236 = vpop.f32.mrf.mxu0
    %v237 = vadd.f32 %v177, %v236
    %v238 = vpop.f32.mrf.mxu0
    %v239 = vadd.f32 %v177, %v238
    %240 = vdwg.mxu0
    %v241 = vpack.c.bf16 %v237, %v237
    %v242 = vpack.c.bf16 %v239, %v239
    %vm243 = vcmask 257024
    %244 = vst.msk [vmem:[#allocation2] sm:$0xf] %vm243, %v241
    %245 = vst.msk [vmem:[#allocation2 + $0x4] sm:$0xf] %vm243, %v242
    // Predicated region
    $region38: #{tpu_custom_call.1} parent=1 // pred_check
      _
    $region39: #{tpu_custom_call.1} parent=1 // pred_check_branch
      %247 = sbr.rel (0) target = $region41
    $region40: #{tpu_custom_call.1} parent=1 // pred_region
      %249 = vsyncadd [#allocation3], 0
      %s250 = sshll.u32 [#allocation2], 4
      %s251 = int_to_ptr.vmem [resolvable:$true] %s250
      %s252 = sshll.u32 %s9, 4
      %s253 = int_to_ptr.hbm [resolvable:$true] %s252
      %258 = dma.vmem_to_hbm [thread:$0]  %s251, 128, %s253, [#allocation3], 64, 64, 4
    $region41: #{tpu_custom_call.1} parent=1 // pred_fallthru
      _
    // Predicated region
    $region42: #{tpu_custom_call.1} parent=1 // pred_check
      _
    $region43: #{tpu_custom_call.1} parent=1 // pred_check_branch
      %260 = sbr.rel (0) target = $region45
    $region44: #{tpu_custom_call.1} parent=1 // pred_region
      %262 = dma.done [#allocation3], 128
    $region45: #{tpu_custom_call.1} parent=1 // pred_fallthru
      _
    %263 = vsyncpa [#allocation3], 1

</llo_original>
